<compile_context>
chip_gen: v7x
topology: tpu7x:2x2x1
jax: 0.10.0
libtpu: 0.0.40
codegen_flags: <defaults>
</compile_context>

<pallas_src>
import functools
import math

import jax
import jax.numpy as jnp
from jax import lax
from jax.experimental import pallas as pl
from jax.experimental.pallas import tpu as pltpu


def _mha_kernel(x_ref, wqkv_ref, bqkv_ref, wo_ref, bo_ref, o_ref,
                *, B, S, D, P, mxu_dtype):
    f32 = jnp.float32
    cdt = x_ref.dtype if mxu_dtype is None else mxu_dtype

    # Fused QKV projection: (M, Din) @ (Din, 3P) -> (M, 3P). Every projection lives in
    # its own 128-lane-aligned slot; padding columns/bias entries are zero.
    x = x_ref[...].astype(cdt)
    qkv = jnp.dot(x, wqkv_ref[...].astype(cdt),
                  preferred_element_type=f32) + bqkv_ref[...]

    q = qkv[:, 0 * P:1 * P].reshape(B, S, P)
    k = qkv[:, 1 * P:2 * P].reshape(B, S, P)
    v = qkv[:, 2 * P:3 * P].reshape(B, S, P)

    # scores = q k^T / sqrt(d_k): contract K on its last dim (no transpose materialized).
    # The zero-padded lanes of q/k contribute nothing, so the result is exact.
    scores = lax.dot_general(
        q.astype(cdt), k.astype(cdt),
        dimension_numbers=(((2,), (2,)), ((0,), (0,))),
        preferred_element_type=f32) * (1.0 / math.sqrt(D))

    # Numerically-stable softmax over keys, kept in f32 (no bf16 VPU on v5e).
    m = jnp.max(scores, axis=-1, keepdims=True)
    e = jnp.exp(scores - m)
    p = e * pl.reciprocal(jnp.sum(e, axis=-1, keepdims=True), approx=True)
    # TODO(synk): Dropout(p=0.1) on p_attn omitted (eval-mode identity); mask=None path only.

    ctx = lax.dot_general(
        p.astype(cdt), v.astype(cdt),
        dimension_numbers=(((2,), (1,)), ((0,), (0,))),
        preferred_element_type=f32)                              # (B, S, P)

    # Output projection on the lane-padded width; padded rows of Wo are zero.
    y = jnp.dot(ctx.reshape(B * S, P).astype(cdt), wo_ref[...].astype(cdt),
                preferred_element_type=f32) + bo_ref[...]
    o_ref[...] = y.astype(o_ref.dtype)


def multi_headed_attention(xq, xk, xv, params, *, mxu_dtype=None):
    """Forward pass of MultiHeadedAttention (eval mode, mask=None).

    params: dict with wq,bq,wk,bk,wv,bv,wo,bo in PyTorch Linear layout (out,in)/(out,).
    mxu_dtype: optional dtype (e.g. jnp.bfloat16) for MXU matmul operands on v6e/v7x;
               accumulation and softmax stay float32.
    """
    B, S, D = xq.shape
    M = B * S
    P = ((D + 127) // 128) * 128          # lane-dense per-projection slot width
    dt = xq.dtype

    # nn.Linear: y = x @ W^T + b  ->  pre-transpose weights to (D_in, D_out).
    wq_t, wk_t, wv_t, wo_t = (params[n].T for n in ("wq", "wk", "wv", "wo"))

    def pad_cols(w):                      # (D, D) -> (D, P)
        return jnp.pad(w, ((0, 0), (0, P - D)))

    if (xq is xk) and (xk is xv):
        # Self-attention: one x @ [Wq | Wk | Wv], each projection in a 128-lane slot.
        x_fused = xq.reshape(M, D)
        w_qkv = jnp.concatenate([pad_cols(wq_t), pad_cols(wk_t), pad_cols(wv_t)], axis=1)
    else:
        # Cross-attention: concat features + block-diagonal weight -> still one matmul.
        x_fused = jnp.concatenate(
            [xq.reshape(M, D), xk.reshape(M, D), xv.reshape(M, D)], axis=1)
        rows = []
        for j, w in enumerate((wq_t, wk_t, wv_t)):
            rows.append(jnp.zeros((D, 3 * P), dt).at[:, j * P:j * P + D].set(w))
        w_qkv = jnp.concatenate(rows, axis=0)

    b_qkv = jnp.zeros((1, 3 * P), dt)
    for j, b in enumerate((params["bq"], params["bk"], params["bv"])):
        b_qkv = b_qkv.at[:, j * P:j * P + D].set(b)

    w_o = jnp.zeros((P, P), dt).at[:D, :D].set(wo_t)
    b_o = jnp.zeros((1, P), dt).at[:, :D].set(params["bo"])

    Din = x_fused.shape[1]
    kernel = functools.partial(_mha_kernel, B=B, S=S, D=D, P=P, mxu_dtype=mxu_dtype)

    cost = pl.CostEstimate(
        flops=2 * M * Din * 3 * P + 4 * B * S * S * P + 2 * M * P * P,
        transcendentals=B * S * S + B * S,
        bytes_accessed=4 * (M * Din + Din * 3 * P + 3 * P + P * P + P + M * P),
    )

    out_padded = pl.pallas_call(
        kernel,
        out_shape=jax.ShapeDtypeStruct((M, P), dt),
        grid=(1,),
        in_specs=[
            pl.BlockSpec((M, Din), lambda i: (0, 0)),
            pl.BlockSpec((Din, 3 * P), lambda i: (0, 0)),
            pl.BlockSpec((1, 3 * P), lambda i: (0, 0)),
            pl.BlockSpec((P, P), lambda i: (0, 0)),
            pl.BlockSpec((1, P), lambda i: (0, 0)),
        ],
        out_specs=pl.BlockSpec((M, P), lambda i: (0, 0)),
        compiler_params=pltpu.CompilerParams(dimension_semantics=("arbitrary",)),
        cost_estimate=cost,
    )(x_fused, w_qkv, b_qkv, w_o, b_o)

    # Strip lane padding and restore (B, S, D).
    return out_padded[:, :D].reshape(B, S, D)


def _init_linear(key, d_in, d_out):
    # PyTorch nn.Linear default init: U(-1/sqrt(d_in), 1/sqrt(d_in)) for W and b.
    kw, kb = jax.random.split(key)
    bound = 1.0 / math.sqrt(d_in)
    w = jax.random.uniform(kw, (d_out, d_in), jnp.float32, -bound, bound)
    b = jax.random.uniform(kb, (d_out,), jnp.float32, -bound, bound)
    return w, b


def _reference(xq, xk, xv, p):
    def lin(x, w, b):
        return x @ w.T + b
    q = lin(xq, p["wq"], p["bq"])
    k = lin(xk, p["wk"], p["bk"])
    v = lin(xv, p["wv"], p["bv"])
    d_k = q.shape[-1]
    scores = jnp.einsum("bqd,bkd->bqk", q, k) / math.sqrt(d_k)
    attn = jax.nn.softmax(scores, axis=-1)
    ctx = jnp.einsum("bqk,bkd->bqd", attn, v)
    return lin(ctx, p["wo"], p["bo"])


if __name__ == "__main__":
    # Small shapes consistent with the module: h=4, d_model=32, batch=2, seq=8.
    B, S, D, H = 2, 8, 32, 4
    assert D % H == 0

    root = jax.random.PRNGKey(0)
    kq, kk, kv, k0, k1, k2, k3 = jax.random.split(root, 7)

    xq = jax.random.normal(kq, (B, S, D), jnp.float32)
    xk = jax.random.normal(kk, (B, S, D), jnp.float32)
    xv = jax.random.normal(kv, (B, S, D), jnp.float32)

    wq, bq = _init_linear(k0, D, D)
    wk, bk = _init_linear(k1, D, D)
    wv, bv = _init_linear(k2, D, D)
    wo, bo = _init_linear(k3, D, D)
    params = dict(wq=wq, bq=bq, wk=wk, bk=bk, wv=wv, bv=bv, wo=wo, bo=bo)

    # Cross-attention path (distinct q/k/v inputs -> block-diagonal fused QKV weight).
    out_x = jax.block_until_ready(multi_headed_attention(xq, xk, xv, params))
    ref_x = _reference(xq, xk, xv, params)
    assert out_x.shape == (B, S, D)
    assert jnp.allclose(out_x, ref_x, atol=2e-3, rtol=2e-3), "cross-attention mismatch"

    # Self-attention path (shared input -> concatenated fused QKV weight).
    out_s = jax.block_until_ready(multi_headed_attention(xq, xq, xq, params))
    ref_s = _reference(xq, xq, xq, params)
    assert jnp.allclose(out_s, ref_s, atol=2e-3, rtol=2e-3), "self-attention mismatch"

    print("KERNEL_OK")
</pallas_src>

<mosaic_0001>
module attributes {stable_mosaic.version = 11 : i64} {
  func.func @_mha_kernel(%arg0: i32, %arg1: memref<16x96xf32, #tpu.memory_space<vmem>>, %arg2: memref<96x384xf32, #tpu.memory_space<vmem>>, %arg3: memref<1x384xf32, #tpu.memory_space<vmem>>, %arg4: memref<128x128xf32, #tpu.memory_space<vmem>>, %arg5: memref<1x128xf32, #tpu.memory_space<vmem>>, %arg6: memref<16x128xf32, #tpu.memory_space<vmem>>) attributes {dimension_semantics = [#tpu.dimension_semantics<arbitrary>], iteration_bounds = array<i64: 1>, scalar_prefetch = 0 : i64, scratch_operands = 0 : i64, tpu.core_type = #tpu.core_type<tc>, window_params = [{pipeline_mode = #tpu.pipeline_mode<synchronous>, transform_indices = @transform_0, window_bounds = array<i64: 16, 96>}, {pipeline_mode = #tpu.pipeline_mode<synchronous>, transform_indices = @transform_1, window_bounds = array<i64: 96, 384>}, {pipeline_mode = #tpu.pipeline_mode<synchronous>, transform_indices = @transform_2, window_bounds = array<i64: 1, 384>}, {pipeline_mode = #tpu.pipeline_mode<synchronous>, transform_indices = @transform_3, window_bounds = array<i64: 128, 128>}, {pipeline_mode = #tpu.pipeline_mode<synchronous>, transform_indices = @transform_4, window_bounds = array<i64: 1, 128>}, {pipeline_mode = #tpu.pipeline_mode<synchronous>, transform_indices = @transform_5, window_bounds = array<i64: 16, 128>}]} {
    %c0 = arith.constant 0 : index
    %c0_0 = arith.constant 0 : index
    %0 = vector.load %arg1[%c0, %c0_0] : memref<16x96xf32, #tpu.memory_space<vmem>>, vector<16x96xf32>
    %c0_1 = arith.constant 0 : index
    %c0_2 = arith.constant 0 : index
    %1 = vector.load %arg2[%c0_1, %c0_2] : memref<96x384xf32, #tpu.memory_space<vmem>>, vector<96x384xf32>
    %cst = arith.constant dense<0.000000e+00> : vector<16x384xf32>
    %2 = tpu.matmul %0, %1, %cst {dimension_numbers = #tpu.dot_dimension_numbers<[1], [0], [0], [1], [0, 0, 1, 1], [], []>} : vector<16x96xf32>, vector<96x384xf32>, vector<16x384xf32> -> vector<16x384xf32>
    %c0_3 = arith.constant 0 : index
    %c0_4 = arith.constant 0 : index
    %3 = vector.load %arg3[%c0_3, %c0_4] : memref<1x384xf32, #tpu.memory_space<vmem>>, vector<1x384xf32>
    %4 = vector.broadcast %3 : vector<1x384xf32> to vector<16x384xf32>
    %5 = arith.addf %2, %4 : vector<16x384xf32>
    %6 = vector.extract_strided_slice %5 {offsets = [0, 0], sizes = [16, 128], strides = [1, 1]} : vector<16x384xf32> to vector<16x128xf32>
    %7 = vector.shape_cast %6 : vector<16x128xf32> to vector<2x8x128xf32>
    %8 = vector.extract_strided_slice %5 {offsets = [0, 128], sizes = [16, 128], strides = [1, 1]} : vector<16x384xf32> to vector<16x128xf32>
    %9 = vector.shape_cast %8 : vector<16x128xf32> to vector<2x8x128xf32>
    %10 = vector.extract_strided_slice %5 {offsets = [0, 256], sizes = [16, 128], strides = [1, 1]} : vector<16x384xf32> to vector<16x128xf32>
    %11 = vector.shape_cast %10 : vector<16x128xf32> to vector<2x8x128xf32>
    %cst_5 = arith.constant dense<0.000000e+00> : vector<2x8x8xf32>
    %12 = tpu.matmul %7, %9, %cst_5 {dimension_numbers = #tpu.dot_dimension_numbers<[2], [2], [1], [1], [0, 0, 0, 1, 1, 1], [0], [0]>} : vector<2x8x128xf32>, vector<2x8x128xf32>, vector<2x8x8xf32> -> vector<2x8x8xf32>
    %cst_6 = arith.constant 0.176776692 : f32
    %13 = vector.broadcast %cst_6 : f32 to vector<2x8x8xf32>
    %14 = arith.mulf %12, %13 : vector<2x8x8xf32>
    %cst_7 = arith.constant dense<0xFF800000> : vector<2x8xf32>
    %15 = vector.multi_reduction <maximumf>, %14, %cst_7 [2] : vector<2x8x8xf32> to vector<2x8xf32>
    %16 = vector.shape_cast %15 : vector<2x8xf32> to vector<2x8x1xf32>
    %17 = vector.broadcast %16 : vector<2x8x1xf32> to vector<2x8x8xf32>
    %18 = arith.subf %14, %17 : vector<2x8x8xf32>
    %19 = math.exp %18 : vector<2x8x8xf32>
    %cst_8 = arith.constant dense<0.000000e+00> : vector<2x8xf32>
    %20 = vector.multi_reduction <add>, %19, %cst_8 [2] : vector<2x8x8xf32> to vector<2x8xf32>
    %21 = vector.shape_cast %20 : vector<2x8xf32> to vector<2x8x1xf32>
    %22 = tpu.reciprocal %21 {approx = true} : vector<2x8x1xf32> -> vector<2x8x1xf32>
    %23 = vector.broadcast %22 : vector<2x8x1xf32> to vector<2x8x8xf32>
    %24 = arith.mulf %19, %23 : vector<2x8x8xf32>
    %cst_9 = arith.constant dense<0.000000e+00> : vector<2x8x128xf32>
    %25 = tpu.matmul %24, %11, %cst_9 {dimension_numbers = #tpu.dot_dimension_numbers<[2], [1], [1], [2], [0, 0, 0, 1, 1, 2], [0], [0]>} : vector<2x8x8xf32>, vector<2x8x128xf32>, vector<2x8x128xf32> -> vector<2x8x128xf32>
    %26 = vector.shape_cast %25 : vector<2x8x128xf32> to vector<16x128xf32>
    %c0_10 = arith.constant 0 : index
    %c0_11 = arith.constant 0 : index
    %27 = vector.load %arg4[%c0_10, %c0_11] : memref<128x128xf32, #tpu.memory_space<vmem>>, vector<128x128xf32>
    %cst_12 = arith.constant dense<0.000000e+00> : vector<16x128xf32>
    %28 = tpu.matmul %26, %27, %cst_12 {dimension_numbers = #tpu.dot_dimension_numbers<[1], [0], [0], [1], [0, 0, 1, 1], [], []>} : vector<16x128xf32>, vector<128x128xf32>, vector<16x128xf32> -> vector<16x128xf32>
    %c0_13 = arith.constant 0 : index
    %c0_14 = arith.constant 0 : index
    %29 = vector.load %arg5[%c0_13, %c0_14] : memref<1x128xf32, #tpu.memory_space<vmem>>, vector<1x128xf32>
    %30 = vector.broadcast %29 : vector<1x128xf32> to vector<16x128xf32>
    %31 = arith.addf %28, %30 : vector<16x128xf32>
    %c0_15 = arith.constant 0 : index
    %c0_16 = arith.constant 0 : index
    %32 = vector.load %arg6[%c0_15, %c0_16] : memref<16x128xf32, #tpu.memory_space<vmem>>, vector<16x128xf32>
    tpu.vector_store %arg6[%c0_15, %c0_16], %31 {strides = array<i32>} : memref<16x128xf32, #tpu.memory_space<vmem>>, vector<16x128xf32>,
    return
  }
  func.func @transform_0(%arg0: i32) -> (i32, i32) {
    %c0_i32 = arith.constant 0 : i32
    %c0_i32_0 = arith.constant 0 : i32
    %c0_i32_1 = arith.constant 0 : i32
    return %c0_i32, %c0_i32_0 : i32, i32
  }
  func.func @transform_1(%arg0: i32) -> (i32, i32) {
    %c0_i32 = arith.constant 0 : i32
    %c0_i32_0 = arith.constant 0 : i32
    %c0_i32_1 = arith.constant 0 : i32
    return %c0_i32, %c0_i32_0 : i32, i32
  }
  func.func @transform_2(%arg0: i32) -> (i32, i32) {
    %c0_i32 = arith.constant 0 : i32
    %c0_i32_0 = arith.constant 0 : i32
    %c0_i32_1 = arith.constant 0 : i32
    return %c0_i32, %c0_i32_0 : i32, i32
  }
  func.func @transform_3(%arg0: i32) -> (i32, i32) {
    %c0_i32 = arith.constant 0 : i32
    %c0_i32_0 = arith.constant 0 : i32
    %c0_i32_1 = arith.constant 0 : i32
    return %c0_i32, %c0_i32_0 : i32, i32
  }
  func.func @transform_4(%arg0: i32) -> (i32, i32) {
    %c0_i32 = arith.constant 0 : i32
    %c0_i32_0 = arith.constant 0 : i32
    %c0_i32_1 = arith.constant 0 : i32
    return %c0_i32, %c0_i32_0 : i32, i32
  }
  func.func @transform_5(%arg0: i32) -> (i32, i32) {
    %c0_i32 = arith.constant 0 : i32
    %c0_i32_0 = arith.constant 0 : i32
    %c0_i32_1 = arith.constant 0 : i32
    return %c0_i32, %c0_i32_0 : i32, i32
  }
}

</mosaic_0001>

<llo_original>
// kernel: tpu_custom_call.1
$region0: #{tpu_custom_call.1}
  #allocation0 [shape = 'u32[]', space=smem, size = 0x4, offset = 0x4, fixed_abs, tag = 'smem constant byte address 0x4 - core index']
  #allocation1 [shape = 'u32[144,128]{1,0:T(1,128)}', space=vmem, size = 0x12000, scoped, tag = 'internal scratch']
  %s0 = inlined_call_operand.hbm [shape: f32[16,96], index: 0, kind: input, shape index: {}]
  %s1 = inlined_call_operand.hbm [shape: f32[96,384], index: 1, kind: input, shape index: {}]
  %s2 = inlined_call_operand.vmem [shape: f32[1,384], index: 2, kind: input, shape index: {}]
  %s3 = inlined_call_operand.hbm [shape: f32[128,128], index: 3, kind: input, shape index: {}]
  %s4 = inlined_call_operand.vmem [shape: f32[1,128], index: 4, kind: input, shape index: {}]
  %s5 = inlined_call_operand.hbm [shape: f32[16,128], index: 5, kind: output, shape index: {}]
  %s6 = sld [smem:[#allocation0]]
  $region42: #{tpu_custom_call.1} parent=0
    _
  %s8 = ssub.s32 1, %s6
  %s9 = scalar_select 0, %s8, %s6
  $region1: #{tpu_custom_call.1} parent=0
    #allocation2 [shape = 'u8[8192]{0}', space=vmem, size = 0x2000, scoped, tag = 'input window, operand 0, single buffered']
    #allocation3 [shape = 's32[1]{0}', space=sflag, size = 0x4, scoped, tag = 'scoped memory for tpu_custom_call.1']
    #allocation4 [shape = 's32[1]{0}', space=sflag, size = 0x4, scoped, tag = 'scoped memory for tpu_custom_call.1']
    #allocation5 [shape = 'u8[147456]{0}', space=vmem, size = 0x24000, scoped, tag = 'input window, operand 1, single buffered']
    #allocation6 [shape = 's32[1]{0}', space=sflag, size = 0x4, scoped, tag = 'scoped memory for tpu_custom_call.1']
    #allocation7 [shape = 'u8[65536]{0}', space=vmem, size = 0x10000, scoped, tag = 'input window, operand 3, single buffered']
    #allocation8 [shape = 'u8[8192]{0}', space=vmem, size = 0x2000, scoped, tag = 'output window, operand 0, single buffered']
    %10 = vsyncpa [#allocation3], 0
    %11 = vsyncpa [#allocation6], 0
    %12 = vsyncpa [#allocation4], 0
    // Predicated region
    $region2: #{tpu_custom_call.1} parent=1 // pred_check
      _
    $region3: #{tpu_custom_call.1} parent=1 // pred_check_branch
      %14 = sbr.rel (0) target = $region5
    $region4: #{tpu_custom_call.1} parent=1 // pred_region
      %s16 = ssub.s32 256, 256
      %17 = vsyncadd [#allocation3], %s16
      %s18 = sshll.u32 [#allocation2], 4
      %s19 = int_to_ptr.vmem [resolvable:$true] %s18
      %24 = dma.hbm_to_vmem [thread:$0]  %s0, 256, %s19, [#allocation3], 128, 128, 8
    $region5: #{tpu_custom_call.1} parent=1 // pred_fallthru
      _
    // Predicated region
    $region6: #{tpu_custom_call.1} parent=1 // pred_check
      _
    $region7: #{tpu_custom_call.1} parent=1 // pred_check_branch
      %26 = sbr.rel (0) target = $region9
    $region8: #{tpu_custom_call.1} parent=1 // pred_region
      %s28 = ssub.s32 4608, 4608
      %29 = vsyncadd [#allocation6], %s28
      %s30 = sshll.u32 [#allocation5], 4
      %s31 = int_to_ptr.vmem [resolvable:$true] %s30
      %36 = dma.hbm_to_vmem [thread:$0]  %s1, 4608, %s31, [#allocation6], 384, 384, 24
    $region9: #{tpu_custom_call.1} parent=1 // pred_fallthru
      _
    // Predicated region
    $region10: #{tpu_custom_call.1} parent=1 // pred_check
      _
    $region11: #{tpu_custom_call.1} parent=1 // pred_check_branch
      %38 = sbr.rel (0) target = $region13
    $region12: #{tpu_custom_call.1} parent=1 // pred_region
      _
    $region13: #{tpu_custom_call.1} parent=1 // pred_fallthru
      _
    // Predicated region
    $region14: #{tpu_custom_call.1} parent=1 // pred_check
      _
    $region15: #{tpu_custom_call.1} parent=1 // pred_check_branch
      %40 = sbr.rel (0) target = $region17
    $region16: #{tpu_custom_call.1} parent=1 // pred_region
      %s42 = ssub.s32 2048, 2048
      %43 = vsyncadd [#allocation6], %s42
      %s44 = sshll.u32 [#allocation7], 4
      %s45 = int_to_ptr.vmem [resolvable:$true] %s44
      %50 = dma.hbm_to_vmem [thread:$0]  %s3, 2048, %s45, [#allocation6], 128, 128, 8
    $region17: #{tpu_custom_call.1} parent=1 // pred_fallthru
      _
    // Predicated region
    $region18: #{tpu_custom_call.1} parent=1 // pred_check
      _
    $region19: #{tpu_custom_call.1} parent=1 // pred_check_branch
      %52 = sbr.rel (0) target = $region21
    $region20: #{tpu_custom_call.1} parent=1 // pred_region
      _
    $region21: #{tpu_custom_call.1} parent=1 // pred_fallthru
      _
    // Predicated region
    $region22: #{tpu_custom_call.1} parent=1 // pred_check
      _
    $region23: #{tpu_custom_call.1} parent=1 // pred_check_branch
      %54 = sbr.rel (0) target = $region25
    $region24: #{tpu_custom_call.1} parent=1 // pred_region
      %55 = dma.done [#allocation3], 256
    $region25: #{tpu_custom_call.1} parent=1 // pred_fallthru
      _
    // Predicated region
    $region26: #{tpu_custom_call.1} parent=1 // pred_check
      _
    $region27: #{tpu_custom_call.1} parent=1 // pred_check_branch
      %57 = sbr.rel (0) target = $region29
    $region28: #{tpu_custom_call.1} parent=1 // pred_region
      %58 = dma.done [#allocation6], 4608
    $region29: #{tpu_custom_call.1} parent=1 // pred_fallthru
      _
    // Predicated region
    $region30: #{tpu_custom_call.1} parent=1 // pred_check
      _
    $region31: #{tpu_custom_call.1} parent=1 // pred_check_branch
      %60 = sbr.rel (0) target = $region33
    $region32: #{tpu_custom_call.1} parent=1 // pred_region
      %61 = dma.done [#allocation6], 2048
    $region33: #{tpu_custom_call.1} parent=1 // pred_fallthru
      _
    %v62 = vld [vmem:[#allocation2] sm:$0xff]
    %v63 = vld [vmem:[#allocation2 + $0x8] sm:$0xff]
    %v64 = vld [vmem:[#allocation5] sm:$0xff]
    %v65 = vld [vmem:[#allocation5 + $0x8] sm:$0xff]
    %v66 = vld [vmem:[#allocation5 + $0x10] sm:$0xff]
    %v67 = vld [vmem:[#allocation5 + $0x18] sm:$0xff]
    %v68 = vld [vmem:[#allocation5 + $0x20] sm:$0xff]
    %v69 = vld [vmem:[#allocation5 + $0x28] sm:$0xff]
    %v70 = vld [vmem:[#allocation5 + $0x30] sm:$0xff]
    %v71 = vld [vmem:[#allocation5 + $0x38] sm:$0xff]
    %v72 = vld [vmem:[#allocation5 + $0x40] sm:$0xff]
    %v73 = vld [vmem:[#allocation5 + $0x48] sm:$0xff]
    %v74 = vld [vmem:[#allocation5 + $0x50] sm:$0xff]
    %v75 = vld [vmem:[#allocation5 + $0x58] sm:$0xff]
    %v76 = vld [vmem:[#allocation5 + $0x60] sm:$0xff]
    %v77 = vld [vmem:[#allocation5 + $0x68] sm:$0xff]
    %v78 = vld [vmem:[#allocation5 + $0x70] sm:$0xff]
    %v79 = vld [vmem:[#allocation5 + $0x78] sm:$0xff]
    %v80 = vld [vmem:[#allocation5 + $0x80] sm:$0xff]
    %v81 = vld [vmem:[#allocation5 + $0x88] sm:$0xff]
    %v82 = vld [vmem:[#allocation5 + $0x90] sm:$0xff]
    %v83 = vld [vmem:[#allocation5 + $0x98] sm:$0xff]
    %v84 = vld [vmem:[#allocation5 + $0xa0] sm:$0xff]
    %v85 = vld [vmem:[#allocation5 + $0xa8] sm:$0xff]
    %v86 = vld [vmem:[#allocation5 + $0xb0] sm:$0xff]
    %v87 = vld [vmem:[#allocation5 + $0xb8] sm:$0xff]
    %v88 = vld [vmem:[#allocation5 + $0xc0] sm:$0xff]
    %v89 = vld [vmem:[#allocation5 + $0xc8] sm:$0xff]
    %v90 = vld [vmem:[#allocation5 + $0xd0] sm:$0xff]
    %v91 = vld [vmem:[#allocation5 + $0xd8] sm:$0xff]
    %v92 = vld [vmem:[#allocation5 + $0xe0] sm:$0xff]
    %v93 = vld [vmem:[#allocation5 + $0xe8] sm:$0xff]
    %v94 = vld [vmem:[#allocation5 + $0xf0] sm:$0xff]
    %v95 = vld [vmem:[#allocation5 + $0xf8] sm:$0xff]
    %v96 = vld [vmem:[#allocation5 + $0x100] sm:$0xff]
    %v97 = vld [vmem:[#allocation5 + $0x108] sm:$0xff]
    %v98 = vld [vmem:[#allocation5 + $0x110] sm:$0xff]
    %v99 = vld [vmem:[#allocation5 + $0x118] sm:$0xff]
    %v100 = vld [vmem:[%s2] sm:$0x7]
    %v102 = vlaneseq
    %v103 = vshrl.u32 %v102, 7
    %v104 = vsub.s32 0, %v103
    %v105 = vrot.slane %v100, %v104
    %v106 = vlaneseq
    %v107 = vshrl.u32 %v106, 7
    %v108 = vsub.s32 1, %v107
    %v109 = vrot.slane %v100, %v108
    %v110 = vlaneseq
    %v111 = vshrl.u32 %v110, 7
    %v112 = vsub.s32 2, %v111
    %v113 = vrot.slane %v100, %v112
    %vm117 = vcmask 785408
    %v119 = vsel %vm117, %v62, 0
    %v122 = vsel %vm117, %v63, 0
    %124 = vmatprep.subr.mxu0 %v65
    %125 = vmatpush1.msra.mxu0 %v64
    %126 = vmatprep.subr.mxu0 %v68
    %127 = vmatpush1.msra.mxu0 %v67
    %128 = vmatprep.subr.mxu0 %v71
    %129 = vmatpush1.msra.mxu0 %v70
    %130 = vmatprep.subr.mxu0 %v74
    %131 = vmatpush1.msra.mxu0 %v73
    %132 = vmatprep.subr.mxu0 %v77
    %133 = vmatpush1.msra.mxu0 %v76
    %134 = vmatprep.subr.mxu0 %v80
    %135 = vmatpush1.msra.mxu0 %v79
    %136 = vmatprep.subr.mxu0 %v83
    %137 = vmatpush1.msra.mxu0 %v82
    %138 = vmatprep.subr.mxu0 %v86
    %139 = vmatpush1.msra.mxu0 %v85
    %140 = vmatprep.subr.mxu0 %v89
    %141 = vmatpush1.msra.mxu0 %v88
    %142 = vmatprep.subr.mxu0 %v92
    %143 = vmatpush1.msra.mxu0 %v91
    %144 = vmatprep.subr.mxu0 %v95
    %145 = vmatpush1.msra.mxu0 %v94
    %146 = vmatprep.subr.mxu0 %v98
    %147 = vmatpush1.msra.mxu0 %v97
    %148 = vmatprep.subr.mxu0 0.0
    %149 = vmatpush1.msra.mxu0 0.0
    %150 = vmatprep.subr.mxu0 0.0
    %151 = vmatpush1.msra.mxu0 0.0
    %152 = vmatprep.subr.mxu0 0.0
    %153 = vmatpush1.msra.mxu0 0.0
    %154 = vmatprep.subr.mxu0 0.0
    %155 = vmatpush1.msra.mxu0 0.0
    %156 = vmatprep.subr.mxu0 0.0
    %157 = vmatpush1.msra.mxu0 0.0
    %158 = vmatprep.subr.mxu0 0.0
    %159 = vmatpush1.msra.mxu0 0.0
    %160 = vmatprep.subr.mxu0 0.0
    %161 = vmatpush1.msra.mxu0 0.0
    %162 = vmatprep.subr.mxu0 0.0
    %163 = vmatpush1.msra.mxu0 0.0
    %164 = vmatprep.subr.mxu0 0.0
    %165 = vmatpush1.msra.mxu0 0.0
    %166 = vmatprep.subr.mxu0 0.0
    %167 = vmatpush1.msra.mxu0 0.0
    %168 = vmatprep.subr.mxu0 0.0
    %169 = vmatpush1.msra.mxu0 0.0
    %170 = vmatprep.subr.mxu0 0.0
    %171 = vmatpush1.msra.mxu0 0.0
    %172 = vmatprep.subr.mxu0 0.0
    %173 = vmatpush1.msra.mxu0 0.0
    %174 = vmatprep.subr.mxu0 0.0
    %175 = vmatpush1.msra.mxu0 0.0
    %176 = vmatprep.subr.mxu0 0.0
    %177 = vmatpush1.msra.mxu0 0.0
    %178 = vmatprep.subr.mxu0 0.0
    %179 = vmatpush1.msra.mxu0 0.0
    %180 = vmatprep.subr.mxu0 0.0
    %181 = vmatpush1.msra.mxu0 0.0
    %182 = vmatprep.subr.mxu0 0.0
    %183 = vmatpush1.msra.mxu0 0.0
    %184 = vmatprep.subr.mxu0 0.0
    %185 = vmatpush1.msra.mxu0 0.0
    %186 = vmatprep.subr.mxu0 0.0
    %187 = vmatpush1.msra.mxu0 0.0
    %188 = vmatprep.mubr.f32.mxu0 0.0
    %189 = vmatmul.mubr.f32.gmra.mrb[0].mxu0 %v119
    %v190 = vpop.f32.mrb[0].mxu0
    %v191 = vadd.f32 %v105, %v190
    %v192 = vpop.f32.mrb[0].mxu0
    %v193 = vadd.f32 %v109, %v192
    %194 = vmatprep.mubr.f32.mxu0 0.0
    %195 = vmatmul.mubr.f32.gmra.mrb[0].mxu0 %v122
    %v196 = vpop.f32.mrb[0].mxu0
    %v197 = vadd.f32 %v105, %v196
    %v198 = vpop.f32.mrb[0].mxu0
    %v199 = vadd.f32 %v109, %v198
    %200 = vdwg.mxu0
    %201 = vmatprep.subr.mxu0 0.0
    %202 = vmatpush1.msra.mxu0 %v66
    %203 = vmatprep.subr.mxu0 0.0
    %204 = vmatpush1.msra.mxu0 %v69
    %205 = vmatprep.subr.mxu0 0.0
    %206 = vmatpush1.msra.mxu0 %v72
    %207 = vmatprep.subr.mxu0 0.0
    %208 = vmatpush1.msra.mxu0 %v75
    %209 = vmatprep.subr.mxu0 0.0
    %210 = vmatpush1.msra.mxu0 %v78
    %211 = vmatprep.subr.mxu0 0.0
    %212 = vmatpush1.msra.mxu0 %v81
    %213 = vmatprep.subr.mxu0 0.0
    %214 = vmatpush1.msra.mxu0 %v84
    %215 = vmatprep.subr.mxu0 0.0
    %216 = vmatpush1.msra.mxu0 %v87
    %217 = vmatprep.subr.mxu0 0.0
    %218 = vmatpush1.msra.mxu0 %v90
    %219 = vmatprep.subr.mxu0 0.0
    %220 = vmatpush1.msra.mxu0 %v93
    %221 = vmatprep.subr.mxu0 0.0
    %222 = vmatpush1.msra.mxu0 %v96
    %223 = vmatprep.subr.mxu0 0.0
    %224 = vmatpush1.msra.mxu0 %v99
    %225 = vmatprep.subr.mxu0 0.0
    %226 = vmatpush1.msra.mxu0 0.0
    %227 = vmatprep.subr.mxu0 0.0
    %228 = vmatpush1.msra.mxu0 0.0
    %229 = vmatprep.subr.mxu0 0.0
    %230 = vmatpush1.msra.mxu0 0.0
    %231 = vmatprep.subr.mxu0 0.0
    %232 = vmatpush1.msra.mxu0 0.0
    %233 = vmatprep.subr.mxu0 0.0
    %234 = vmatpush1.msra.mxu0 0.0
    %235 = vmatprep.subr.mxu0 0.0
    %236 = vmatpush1.msra.mxu0 0.0
    %237 = vmatprep.subr.mxu0 0.0
    %238 = vmatpush1.msra.mxu0 0.0
    %239 = vmatprep.subr.mxu0 0.0
    %240 = vmatpush1.msra.mxu0 0.0
    %241 = vmatprep.subr.mxu0 0.0
    %242 = vmatpush1.msra.mxu0 0.0
    %243 = vmatprep.subr.mxu0 0.0
    %244 = vmatpush1.msra.mxu0 0.0
    %245 = vmatprep.subr.mxu0 0.0
    %246 = vmatpush1.msra.mxu0 0.0
    %247 = vmatprep.subr.mxu0 0.0
    %248 = vmatpush1.msra.mxu0 0.0
    %249 = vmatprep.subr.mxu0 0.0
    %250 = vmatpush1.msra.mxu0 0.0
    %251 = vmatprep.subr.mxu0 0.0
    %252 = vmatpush1.msra.mxu0 0.0
    %253 = vmatprep.subr.mxu0 0.0
    %254 = vmatpush1.msra.mxu0 0.0
    %255 = vmatprep.subr.mxu0 0.0
    %256 = vmatpush1.msra.mxu0 0.0
    %257 = vmatprep.subr.mxu0 0.0
    %258 = vmatpush1.msra.mxu0 0.0
    %259 = vmatprep.subr.mxu0 0.0
    %260 = vmatpush1.msra.mxu0 0.0
    %261 = vmatprep.subr.mxu0 0.0
    %262 = vmatpush1.msra.mxu0 0.0
    %263 = vmatprep.subr.mxu0 0.0
    %264 = vmatpush1.msra.mxu0 0.0
    %265 = vmatprep.mubr.f32.mxu0 0.0
    %266 = vmatmul.mubr.f32.gmra.mrb[0].mxu0 %v119
    %v267 = vpop.f32.mrb[0].mxu0
    %v268 = vadd.f32 %v113, %v267
    %v269 = vpop.f32.mrb[0].mxu0
    %270 = vmatprep.mubr.f32.mxu0 0.0
    %271 = vmatmul.mubr.f32.gmra.mrb[0].mxu0 %v122
    %v272 = vpop.f32.mrb[0].mxu0
    %v273 = vadd.f32 %v113, %v272
    %v274 = vpop.f32.mrb[0].mxu0
    %275 = vdwg.mxu0
    %276 = vmatprep.subr.mxu0 0.0
    %277 = vmatpush1.xpose.msra.mxu0 %v193
    %278 = vmatprep.subr.mxu0 0.0
    %279 = vmatpush1.xpose.msra.mxu0 0.0
    %280 = vmatprep.subr.mxu0 0.0
    %281 = vmatpush1.xpose.msra.mxu0 0.0
    %282 = vmatprep.subr.mxu0 0.0
    %283 = vmatpush1.xpose.msra.mxu0 0.0
    %284 = vmatprep.subr.mxu0 0.0
    %285 = vmatpush1.xpose.msra.mxu0 0.0
    %286 = vmatprep.subr.mxu0 0.0
    %287 = vmatpush1.xpose.msra.mxu0 0.0
    %288 = vmatprep.subr.mxu0 0.0
    %289 = vmatpush1.xpose.msra.mxu0 0.0
    %290 = vmatprep.subr.mxu0 0.0
    %291 = vmatpush1.xpose.msra.mxu0 0.0
    %292 = vmatprep.subr.mxu0 0.0
    %293 = vmatpush1.xpose.msra.mxu0 0.0
    %294 = vmatprep.subr.mxu0 0.0
    %295 = vmatpush1.xpose.msra.mxu0 0.0
    %296 = vmatprep.subr.mxu0 0.0
    %297 = vmatpush1.xpose.msra.mxu0 0.0
    %298 = vmatprep.subr.mxu0 0.0
    %299 = vmatpush1.xpose.msra.mxu0 0.0
    %300 = vmatprep.subr.mxu0 0.0
    %301 = vmatpush1.xpose.msra.mxu0 0.0
    %302 = vmatprep.subr.mxu0 0.0
    %303 = vmatpush1.xpose.msra.mxu0 0.0
    %304 = vmatprep.subr.mxu0 0.0
    %305 = vmatpush1.xpose.msra.mxu0 0.0
    %306 = vmatprep.subr.mxu0 0.0
    %307 = vmatpush1.xpose.msra.mxu0 0.0
    %308 = vmatprep.subr.mxu0 0.0
    %309 = vmatpush1.xpose.msra.mxu0 0.0
    %310 = vmatprep.subr.mxu0 0.0
    %311 = vmatpush1.xpose.msra.mxu0 0.0
    %312 = vmatprep.subr.mxu0 0.0
    %313 = vmatpush1.xpose.msra.mxu0 0.0
    %314 = vmatprep.subr.mxu0 0.0
    %315 = vmatpush1.xpose.msra.mxu0 0.0
    %316 = vmatprep.subr.mxu0 0.0
    %317 = vmatpush1.xpose.msra.mxu0 0.0
    %318 = vmatprep.subr.mxu0 0.0
    %319 = vmatpush1.xpose.msra.mxu0 0.0
    %320 = vmatprep.subr.mxu0 0.0
    %321 = vmatpush1.xpose.msra.mxu0 0.0
    %322 = vmatprep.subr.mxu0 0.0
    %323 = vmatpush1.xpose.msra.mxu0 0.0
    %324 = vmatprep.subr.mxu0 0.0
    %325 = vmatpush1.xpose.msra.mxu0 0.0
    %326 = vmatprep.subr.mxu0 0.0
    %327 = vmatpush1.xpose.msra.mxu0 0.0
    %328 = vmatprep.subr.mxu0 0.0
    %329 = vmatpush1.xpose.msra.mxu0 0.0
    %330 = vmatprep.subr.mxu0 0.0
    %331 = vmatpush1.xpose.msra.mxu0 0.0
    %332 = vmatprep.subr.mxu0 0.0
    %333 = vmatpush1.xpose.msra.mxu0 0.0
    %334 = vmatprep.subr.mxu0 0.0
    %335 = vmatpush1.xpose.msra.mxu0 0.0
    %336 = vmatprep.subr.mxu0 0.0
    %337 = vmatpush1.xpose.msra.mxu0 0.0
    %338 = vmatprep.subr.mxu0 0.0
    %339 = vmatpush1.xpose.msra.mxu0 0.0
    %340 = vmatprep.mubr.f32.mxu0 0.0
    %341 = vmatmul.mubr.f32.gmra.mrb[0].mxu0 %v191
    %v342 = vpop.f32.mrb[0].mxu0
    %v343 = vadd.f32 0.0, %v342
    %v344 = vpop.f32.mrb[0].mxu0
    %345 = vdwg.mxu0
    %346 = vmatprep.subr.mxu0 0.0
    %347 = vmatpush1.xpose.msra.mxu0 %v199
    %348 = vmatprep.subr.mxu0 0.0
    %349 = vmatpush1.xpose.msra.mxu0 0.0
    %350 = vmatprep.subr.mxu0 0.0
    %351 = vmatpush1.xpose.msra.mxu0 0.0
    %352 = vmatprep.subr.mxu0 0.0
    %353 = vmatpush1.xpose.msra.mxu0 0.0
    %354 = vmatprep.subr.mxu0 0.0
    %355 = vmatpush1.xpose.msra.mxu0 0.0
    %356 = vmatprep.subr.mxu0 0.0
    %357 = vmatpush1.xpose.msra.mxu0 0.0
    %358 = vmatprep.subr.mxu0 0.0
    %359 = vmatpush1.xpose.msra.mxu0 0.0
    %360 = vmatprep.subr.mxu0 0.0
    %361 = vmatpush1.xpose.msra.mxu0 0.0
    %362 = vmatprep.subr.mxu0 0.0
    %363 = vmatpush1.xpose.msra.mxu0 0.0
    %364 = vmatprep.subr.mxu0 0.0
    %365 = vmatpush1.xpose.msra.mxu0 0.0
    %366 = vmatprep.subr.mxu0 0.0
    %367 = vmatpush1.xpose.msra.mxu0 0.0
    %368 = vmatprep.subr.mxu0 0.0
    %369 = vmatpush1.xpose.msra.mxu0 0.0
    %370 = vmatprep.subr.mxu0 0.0
    %371 = vmatpush1.xpose.msra.mxu0 0.0
    %372 = vmatprep.subr.mxu0 0.0
    %373 = vmatpush1.xpose.msra.mxu0 0.0
    %374 = vmatprep.subr.mxu0 0.0
    %375 = vmatpush1.xpose.msra.mxu0 0.0
    %376 = vmatprep.subr.mxu0 0.0
    %377 = vmatpush1.xpose.msra.mxu0 0.0
    %378 = vmatprep.subr.mxu0 0.0
    %379 = vmatpush1.xpose.msra.mxu0 0.0
    %380 = vmatprep.subr.mxu0 0.0
    %381 = vmatpush1.xpose.msra.mxu0 0.0
    %382 = vmatprep.subr.mxu0 0.0
    %383 = vmatpush1.xpose.msra.mxu0 0.0
    %384 = vmatprep.subr.mxu0 0.0
    %385 = vmatpush1.xpose.msra.mxu0 0.0
    %386 = vmatprep.subr.mxu0 0.0
    %387 = vmatpush1.xpose.msra.mxu0 0.0
    %388 = vmatprep.subr.mxu0 0.0
    %389 = vmatpush1.xpose.msra.mxu0 0.0
    %390 = vmatprep.subr.mxu0 0.0
    %391 = vmatpush1.xpose.msra.mxu0 0.0
    %392 = vmatprep.subr.mxu0 0.0
    %393 = vmatpush1.xpose.msra.mxu0 0.0
    %394 = vmatprep.subr.mxu0 0.0
    %395 = vmatpush1.xpose.msra.mxu0 0.0
    %396 = vmatprep.subr.mxu0 0.0
    %397 = vmatpush1.xpose.msra.mxu0 0.0
    %398 = vmatprep.subr.mxu0 0.0
    %399 = vmatpush1.xpose.msra.mxu0 0.0
    %400 = vmatprep.subr.mxu0 0.0
    %401 = vmatpush1.xpose.msra.mxu0 0.0
    %402 = vmatprep.subr.mxu0 0.0
    %403 = vmatpush1.xpose.msra.mxu0 0.0
    %404 = vmatprep.subr.mxu0 0.0
    %405 = vmatpush1.xpose.msra.mxu0 0.0
    %406 = vmatprep.subr.mxu0 0.0
    %407 = vmatpush1.xpose.msra.mxu0 0.0
    %408 = vmatprep.subr.mxu0 0.0
    %409 = vmatpush1.xpose.msra.mxu0 0.0
    %410 = vmatprep.mubr.f32.mxu0 0.0
    %411 = vmatmul.mubr.f32.gmra.mrb[0].mxu0 %v197
    %v412 = vpop.f32.mrb[0].mxu0
    %v413 = vadd.f32 0.0, %v412
    %v414 = vpop.f32.mrb[0].mxu0
    %415 = vdwg.mxu0
    %v416 = vmul.f32 %v343, 0.17677669
    %v417 = vmul.f32 %v413, 0.17677669
    %vm418 = vcmask 64512
    %v419 = vsel %vm418, %v416, -inf
    %420 = vmax.xlane.f32.xlu0 %v419
    %v421 = vpop.xlane.xlu0 %420
    %v422 = vsel %vm418, %v417, -inf
    %423 = vmax.xlane.f32.xlu0 %v422
    %v424 = vpop.xlane.xlu0 %423
    %v425 = vsub.f32 %v416, %v421
    %v426 = vsub.f32 %v417, %v424
    %v427 = vmul.f32 %v425, 1.442695
    %v428 = vpow.pop %v427
    %v429 = vmul.f32 %v426, 1.442695
    %v430 = vpow.pop %v429
    %v431 = vsel %vm418, %v428, 0.0
    %432 = vadd.xlane.f32.xlu0 %v431
    %v433 = vpop.xlane.xlu0 %432
    %v434 = vsel %vm418, %v430, 0.0
    %435 = vadd.xlane.f32.xlu0 %v434
    %v436 = vpop.xlane.xlu0 %435
    %v437 = vrcp.pop %v433
    %v438 = vrcp.pop %v436
    %v439 = vmul.f32 %v428, %v437
    %v440 = vmul.f32 %v430, %v438
    %v442 = vsel %vm418, %v439, 0
    %444 = vmatprep.subr.mxu0 0.0
    %445 = vmatpush1.msra.mxu0 %v268
    %446 = vmatprep.subr.mxu0 0.0
    %447 = vmatpush1.msra.mxu0 0.0
    %448 = vmatprep.subr.mxu0 0.0
    %449 = vmatpush1.msra.mxu0 0.0
    %450 = vmatprep.subr.mxu0 0.0
    %451 = vmatpush1.msra.mxu0 0.0
    %452 = vmatprep.subr.mxu0 0.0
    %453 = vmatpush1.msra.mxu0 0.0
    %454 = vmatprep.subr.mxu0 0.0
    %455 = vmatpush1.msra.mxu0 0.0
    %456 = vmatprep.subr.mxu0 0.0
    %457 = vmatpush1.msra.mxu0 0.0
    %458 = vmatprep.subr.mxu0 0.0
    %459 = vmatpush1.msra.mxu0 0.0
    %460 = vmatprep.subr.mxu0 0.0
    %461 = vmatpush1.msra.mxu0 0.0
    %462 = vmatprep.subr.mxu0 0.0
    %463 = vmatpush1.msra.mxu0 0.0
    %464 = vmatprep.subr.mxu0 0.0
    %465 = vmatpush1.msra.mxu0 0.0
    %466 = vmatprep.subr.mxu0 0.0
    %467 = vmatpush1.msra.mxu0 0.0
    %468 = vmatprep.subr.mxu0 0.0
    %469 = vmatpush1.msra.mxu0 0.0
    %470 = vmatprep.subr.mxu0 0.0
    %471 = vmatpush1.msra.mxu0 0.0
    %472 = vmatprep.subr.mxu0 0.0
    %473 = vmatpush1.msra.mxu0 0.0
    %474 = vmatprep.subr.mxu0 0.0
    %475 = vmatpush1.msra.mxu0 0.0
    %476 = vmatprep.subr.mxu0 0.0
    %477 = vmatpush1.msra.mxu0 0.0
    %478 = vmatprep.subr.mxu0 0.0
    %479 = vmatpush1.msra.mxu0 0.0
    %480 = vmatprep.subr.mxu0 0.0
    %481 = vmatpush1.msra.mxu0 0.0
    %482 = vmatprep.subr.mxu0 0.0
    %483 = vmatpush1.msra.mxu0 0.0
    %484 = vmatprep.subr.mxu0 0.0
    %485 = vmatpush1.msra.mxu0 0.0
    %486 = vmatprep.subr.mxu0 0.0
    %487 = vmatpush1.msra.mxu0 0.0
    %488 = vmatprep.subr.mxu0 0.0
    %489 = vmatpush1.msra.mxu0 0.0
    %490 = vmatprep.subr.mxu0 0.0
    %491 = vmatpush1.msra.mxu0 0.0
    %492 = vmatprep.subr.mxu0 0.0
    %493 = vmatpush1.msra.mxu0 0.0
    %494 = vmatprep.subr.mxu0 0.0
    %495 = vmatpush1.msra.mxu0 0.0
    %496 = vmatprep.subr.mxu0 0.0
    %497 = vmatpush1.msra.mxu0 0.0
    %498 = vmatprep.subr.mxu0 0.0
    %499 = vmatpush1.msra.mxu0 0.0
    %500 = vmatprep.subr.mxu0 0.0
    %501 = vmatpush1.msra.mxu0 0.0
    %502 = vmatprep.subr.mxu0 0.0
    %503 = vmatpush1.msra.mxu0 0.0
    %504 = vmatprep.subr.mxu0 0.0
    %505 = vmatpush1.msra.mxu0 0.0
    %506 = vmatprep.subr.mxu0 0.0
    %507 = vmatpush1.msra.mxu0 0.0
    %508 = vmatprep.mubr.f32.mxu0 0.0
    %509 = vmatmul.mubr.f32.gmra.mrb[0].mxu0 %v442
    %v510 = vpop.f32.mrb[0].mxu0
    %v511 = vadd.f32 0.0, %v510
    %v512 = vpop.f32.mrb[0].mxu0
    %513 = vdwg.mxu0
    %v515 = vsel %vm418, %v440, 0
    %517 = vmatprep.subr.mxu0 0.0
    %518 = vmatpush1.msra.mxu0 %v273
    %519 = vmatprep.subr.mxu0 0.0
    %520 = vmatpush1.msra.mxu0 0.0
    %521 = vmatprep.subr.mxu0 0.0
    %522 = vmatpush1.msra.mxu0 0.0
    %523 = vmatprep.subr.mxu0 0.0
    %524 = vmatpush1.msra.mxu0 0.0
    %525 = vmatprep.subr.mxu0 0.0
    %526 = vmatpush1.msra.mxu0 0.0
    %527 = vmatprep.subr.mxu0 0.0
    %528 = vmatpush1.msra.mxu0 0.0
    %529 = vmatprep.subr.mxu0 0.0
    %530 = vmatpush1.msra.mxu0 0.0
    %531 = vmatprep.subr.mxu0 0.0
    %532 = vmatpush1.msra.mxu0 0.0
    %533 = vmatprep.subr.mxu0 0.0
    %534 = vmatpush1.msra.mxu0 0.0
    %535 = vmatprep.subr.mxu0 0.0
    %536 = vmatpush1.msra.mxu0 0.0
    %537 = vmatprep.subr.mxu0 0.0
    %538 = vmatpush1.msra.mxu0 0.0
    %539 = vmatprep.subr.mxu0 0.0
    %540 = vmatpush1.msra.mxu0 0.0
    %541 = vmatprep.subr.mxu0 0.0
    %542 = vmatpush1.msra.mxu0 0.0
    %543 = vmatprep.subr.mxu0 0.0
    %544 = vmatpush1.msra.mxu0 0.0
    %545 = vmatprep.subr.mxu0 0.0
    %546 = vmatpush1.msra.mxu0 0.0
    %547 = vmatprep.subr.mxu0 0.0
    %548 = vmatpush1.msra.mxu0 0.0
    %549 = vmatprep.subr.mxu0 0.0
    %550 = vmatpush1.msra.mxu0 0.0
    %551 = vmatprep.subr.mxu0 0.0
    %552 = vmatpush1.msra.mxu0 0.0
    %553 = vmatprep.subr.mxu0 0.0
    %554 = vmatpush1.msra.mxu0 0.0
    %555 = vmatprep.subr.mxu0 0.0
    %556 = vmatpush1.msra.mxu0 0.0
    %557 = vmatprep.subr.mxu0 0.0
    %558 = vmatpush1.msra.mxu0 0.0
    %559 = vmatprep.subr.mxu0 0.0
    %560 = vmatpush1.msra.mxu0 0.0
    %561 = vmatprep.subr.mxu0 0.0
    %562 = vmatpush1.msra.mxu0 0.0
    %563 = vmatprep.subr.mxu0 0.0
    %564 = vmatpush1.msra.mxu0 0.0
    %565 = vmatprep.subr.mxu0 0.0
    %566 = vmatpush1.msra.mxu0 0.0
    %567 = vmatprep.subr.mxu0 0.0
    %568 = vmatpush1.msra.mxu0 0.0
    %569 = vmatprep.subr.mxu0 0.0
    %570 = vmatpush1.msra.mxu0 0.0
    %571 = vmatprep.subr.mxu0 0.0
    %572 = vmatpush1.msra.mxu0 0.0
    %573 = vmatprep.subr.mxu0 0.0
    %574 = vmatpush1.msra.mxu0 0.0
    %575 = vmatprep.subr.mxu0 0.0
    %576 = vmatpush1.msra.mxu0 0.0
    %577 = vmatprep.subr.mxu0 0.0
    %578 = vmatpush1.msra.mxu0 0.0
    %579 = vmatprep.subr.mxu0 0.0
    %580 = vmatpush1.msra.mxu0 0.0
    %581 = vmatprep.mubr.f32.mxu0 0.0
    %582 = vmatmul.mubr.f32.gmra.mrb[0].mxu0 %v515
    %v583 = vpop.f32.mrb[0].mxu0
    %v584 = vadd.f32 0.0, %v583
    %v585 = vpop.f32.mrb[0].mxu0
    %586 = vdwg.mxu0
    %v587 = vld [vmem:[#allocation7] sm:$0xff]
    %v588 = vld [vmem:[#allocation7 + $0x8] sm:$0xff]
    %v589 = vld [vmem:[#allocation7 + $0x10] sm:$0xff]
    %v590 = vld [vmem:[#allocation7 + $0x18] sm:$0xff]
    %v591 = vld [vmem:[#allocation7 + $0x20] sm:$0xff]
    %v592 = vld [vmem:[#allocation7 + $0x28] sm:$0xff]
    %v593 = vld [vmem:[#allocation7 + $0x30] sm:$0xff]
    %v594 = vld [vmem:[#allocation7 + $0x38] sm:$0xff]
    %v595 = vld [vmem:[#allocation7 + $0x40] sm:$0xff]
    %v596 = vld [vmem:[#allocation7 + $0x48] sm:$0xff]
    %v597 = vld [vmem:[#allocation7 + $0x50] sm:$0xff]
    %v598 = vld [vmem:[#allocation7 + $0x58] sm:$0xff]
    %v599 = vld [vmem:[#allocation7 + $0x60] sm:$0xff]
    %v600 = vld [vmem:[#allocation7 + $0x68] sm:$0xff]
    %v601 = vld [vmem:[#allocation7 + $0x70] sm:$0xff]
    %v602 = vld [vmem:[#allocation7 + $0x78] sm:$0xff]
    %v603 = vld [vmem:[%s4] sm:$0x1]
    %v605 = vlaneseq
    %v606 = vshrl.u32 %v605, 7
    %v607 = vsub.s32 0, %v606
    %v608 = vrot.slane %v603, %v607
    %610 = vmatprep.subr.mxu0 0.0
    %611 = vmatpush1.msra.mxu0 %v587
    %612 = vmatprep.subr.mxu0 0.0
    %613 = vmatpush1.msra.mxu0 %v588
    %614 = vmatprep.subr.mxu0 0.0
    %615 = vmatpush1.msra.mxu0 %v589
    %616 = vmatprep.subr.mxu0 0.0
    %617 = vmatpush1.msra.mxu0 %v590
    %618 = vmatprep.subr.mxu0 0.0
    %619 = vmatpush1.msra.mxu0 %v591
    %620 = vmatprep.subr.mxu0 0.0
    %621 = vmatpush1.msra.mxu0 %v592
    %622 = vmatprep.subr.mxu0 0.0
    %623 = vmatpush1.msra.mxu0 %v593
    %624 = vmatprep.subr.mxu0 0.0
    %625 = vmatpush1.msra.mxu0 %v594
    %626 = vmatprep.subr.mxu0 0.0
    %627 = vmatpush1.msra.mxu0 %v595
    %628 = vmatprep.subr.mxu0 0.0
    %629 = vmatpush1.msra.mxu0 %v596
    %630 = vmatprep.subr.mxu0 0.0
    %631 = vmatpush1.msra.mxu0 %v597
    %632 = vmatprep.subr.mxu0 0.0
    %633 = vmatpush1.msra.mxu0 %v598
    %634 = vmatprep.subr.mxu0 0.0
    %635 = vmatpush1.msra.mxu0 %v599
    %636 = vmatprep.subr.mxu0 0.0
    %637 = vmatpush1.msra.mxu0 %v600
    %638 = vmatprep.subr.mxu0 0.0
    %639 = vmatpush1.msra.mxu0 %v601
    %640 = vmatprep.subr.mxu0 0.0
    %641 = vmatpush1.msra.mxu0 %v602
    %642 = vmatprep.subr.mxu0 0.0
    %643 = vmatpush1.msra.mxu0 0.0
    %644 = vmatprep.subr.mxu0 0.0
    %645 = vmatpush1.msra.mxu0 0.0
    %646 = vmatprep.subr.mxu0 0.0
    %647 = vmatpush1.msra.mxu0 0.0
    %648 = vmatprep.subr.mxu0 0.0
    %649 = vmatpush1.msra.mxu0 0.0
    %650 = vmatprep.subr.mxu0 0.0
    %651 = vmatpush1.msra.mxu0 0.0
    %652 = vmatprep.subr.mxu0 0.0
    %653 = vmatpush1.msra.mxu0 0.0
    %654 = vmatprep.subr.mxu0 0.0
    %655 = vmatpush1.msra.mxu0 0.0
    %656 = vmatprep.subr.mxu0 0.0
    %657 = vmatpush1.msra.mxu0 0.0
    %658 = vmatprep.subr.mxu0 0.0
    %659 = vmatpush1.msra.mxu0 0.0
    %660 = vmatprep.subr.mxu0 0.0
    %661 = vmatpush1.msra.mxu0 0.0
    %662 = vmatprep.subr.mxu0 0.0
    %663 = vmatpush1.msra.mxu0 0.0
    %664 = vmatprep.subr.mxu0 0.0
    %665 = vmatpush1.msra.mxu0 0.0
    %666 = vmatprep.subr.mxu0 0.0
    %667 = vmatpush1.msra.mxu0 0.0
    %668 = vmatprep.subr.mxu0 0.0
    %669 = vmatpush1.msra.mxu0 0.0
    %670 = vmatprep.subr.mxu0 0.0
    %671 = vmatpush1.msra.mxu0 0.0
    %672 = vmatprep.subr.mxu0 0.0
    %673 = vmatpush1.msra.mxu0 0.0
    %674 = vmatprep.mubr.f32.mxu0 0.0
    %675 = vmatmul.mubr.f32.gmra.mrb[0].mxu0 %v511
    %v676 = vpop.f32.mrb[0].mxu0
    %v677 = vadd.f32 %v608, %v676
    %v678 = vpop.f32.mrb[0].mxu0
    %679 = vmatprep.mubr.f32.mxu0 0.0
    %680 = vmatmul.mubr.f32.gmra.mrb[0].mxu0 %v584
    %v681 = vpop.f32.mrb[0].mxu0
    %v682 = vadd.f32 %v608, %v681
    %v683 = vpop.f32.mrb[0].mxu0
    %684 = vdwg.mxu0
    %685 = vst [vmem:[#allocation8] sm:$0xff] %v677
    %686 = vst [vmem:[#allocation8 + $0x8] sm:$0xff] %v682
    // Predicated region
    $region34: #{tpu_custom_call.1} parent=1 // pred_check
      _
    $region35: #{tpu_custom_call.1} parent=1 // pred_check_branch
      %688 = sbr.rel (0) target = $region37
    $region36: #{tpu_custom_call.1} parent=1 // pred_region
      %s690 = ssub.s32 256, 256
      %691 = vsyncadd [#allocation4], %s690
      %s692 = sshll.u32 [#allocation8], 4
      %s693 = int_to_ptr.vmem [resolvable:$true] %s692
      %698 = dma.vmem_to_hbm [thread:$0]  %s693, 256, %s5, [#allocation4], 128, 128, 8
    $region37: #{tpu_custom_call.1} parent=1 // pred_fallthru
      _
    // Predicated region
    $region38: #{tpu_custom_call.1} parent=1 // pred_check
      _
    $region39: #{tpu_custom_call.1} parent=1 // pred_check_branch
      %700 = sbr.rel (0) target = $region41
    $region40: #{tpu_custom_call.1} parent=1 // pred_region
      %701 = dma.done [#allocation4], 256
    $region41: #{tpu_custom_call.1} parent=1 // pred_fallthru
      _
    %702 = vsyncpa [#allocation3], 1
    %703 = vsyncpa [#allocation6], 1
    %704 = vsyncpa [#allocation4], 1

</llo_original>
